<compile_context>
chip_gen: v7x
topology: tpu7x:2x2x1
jax: 0.10.0
libtpu: 0.0.40
codegen_flags: <defaults>
</compile_context>

<pallas_src>
import functools

import jax
import jax.numpy as jnp
from jax.experimental import pallas as pl
from jax.experimental.pallas import tpu as pltpu


def _moving_avg_kernel(x_ref, o_ref, *rest, kernel_size, stride, l_in, l_out,
                       with_residual):
    r_ref = rest[0] if with_residual else None
    inv_k = 1.0 / kernel_size

    # ---- Bulk rows [1, l_out-2]: windows lie entirely inside x -------------
    # Output row i (stride s) averages x[i*s - 1 + k], k = 0..K-1, which stays
    # within [0, L-1] for every i in [1, l_out-2]; only rows 0 and l_out-1 can
    # touch the 1-element replicate padding.
    n_bulk = l_out - 2
    if n_bulk > 0:
        # TODO(synk): for large kernel_size (e.g. 25-tap windows) a cumsum /
        # prefix-sum formulation would cut the O(K) VALU adds per element.
        if stride == 1:
            terms = [x_ref[:, k:k + n_bulk, :].astype(jnp.float32)
                     for k in range(kernel_size)]
        else:
            terms = [x_ref[:, pl.ds(stride - 1 + k, n_bulk, stride=stride), :]
                     .astype(jnp.float32) for k in range(kernel_size)]
        acc = terms[0]
        for t in terms[1:]:
            acc = acc + t
        bulk_trend = acc * inv_k
        o_ref[:, 1:1 + n_bulk, :] = bulk_trend.astype(o_ref.dtype)
        if with_residual:
            # Wrapper guarantees stride == 1 and l_out == l_in here, so output
            # row i corresponds directly to input row i.
            center = x_ref[:, 1:1 + n_bulk, :].astype(jnp.float32)
            r_ref[:, 1:1 + n_bulk, :] = (center - bulk_trend).astype(r_ref.dtype)

    # ---- Boundary rows (may include the replicated front / end element) ----
    for i in sorted({0, l_out - 1}):
        j0 = i * stride                          # window start, padded coords
        j1 = j0 + kernel_size                    # window end (excl), padded
        n_front = max(0, min(j1, 1) - j0)        # copies of padded idx 0 -> x[0]
        n_end = max(0, j1 - max(j0, l_in + 1))   # copies of padded L+1 -> x[L-1]
        mid_lo = max(j0, 1) - 1                  # interior part, x coords
        mid_hi = min(j1, l_in + 1) - 1           # exclusive
        acc = None
        if mid_hi > mid_lo:
            mid = x_ref[:, mid_lo:mid_hi, :].astype(jnp.float32)
            acc = jnp.sum(mid, axis=1, keepdims=True)
        if n_front:
            f = x_ref[:, 0:1, :].astype(jnp.float32) * float(n_front)
            acc = f if acc is None else acc + f
        if n_end:
            e = x_ref[:, l_in - 1:l_in, :].astype(jnp.float32) * float(n_end)
            acc = e if acc is None else acc + e
        row_trend = acc * inv_k
        o_ref[:, i:i + 1, :] = row_trend.astype(o_ref.dtype)
        if with_residual:
            xi = x_ref[:, i:i + 1, :].astype(jnp.float32)
            r_ref[:, i:i + 1, :] = (xi - row_trend).astype(r_ref.dtype)


def _pick_tiles(batch, l_in, l_out, n_channels, itemsize, n_outputs,
                budget_bytes):
    """Choose (batch_tile, channel_tile, est_vmem_bytes).

    Channel tiles are multiples of 128 (lane-dense stores) whenever C > 128;
    the working-set estimate covers the double-buffered in/out blocks plus an
    allowance for the f32 accumulation temporaries.
    """
    rows8 = lambda n: -(-n // 8) * 8
    lanes128 = lambda n: -(-n // 128) * 128

    def est(bt, ct):
        lanes = lanes128(ct)
        in_blk = 2 * bt * rows8(l_in) * lanes * itemsize          # dbl-buffered in
        out_blk = 2 * n_outputs * bt * rows8(l_out) * lanes * itemsize
        f32_tmp = 3 * bt * rows8(l_out) * lanes * 4               # accum temps
        return in_blk + out_blk + f32_tmp

    # --- channel tile ---
    if n_channels <= 128:
        # TODO(synk): for C < 128 the output stores are lane-masked; folding
        # (batch, channel) into the lane axis would make them lane-dense but
        # costs an extra wrapper-side relayout HBM pass -- not worth it here.
        ct = n_channels
    else:
        fitting = [m for m in range(128, n_channels + 1, 128)
                   if est(1, m) <= budget_bytes]
        if fitting:
            divisors = [m for m in fitting if n_channels % m == 0]
            ct = max(divisors) if divisors else max(fitting)
        else:
            ct = 128

    # --- batch tile: largest Bt whose working set still fits the budget ---
    bt = 1
    for cand in range(2, batch + 1):
        if est(cand, ct) <= budget_bytes:
            bt = cand
        else:
            break

    # --- keep >= 2 grid steps when possible (v7x has 2 TensorCores) ---
    n_b = -(-batch // bt)
    n_c = -(-n_channels // ct)
    if n_b * n_c < 2:
        if batch >= 2:
            bt = (batch + 1) // 2
        elif ct > 128:
            ct = max(128, ((ct // 2 + 127) // 128) * 128)
    return bt, ct, est(bt, ct)


def moving_avg(x, kernel_size, stride, return_residual=False):
    """x: (B, L, C) -> trend (B, Lout, C), matching the PyTorch module.

    With return_residual=True (requires stride == 1 and Lout == L, i.e.
    kernel_size == 3 under this module's fixed 1-element padding) also returns
    x - trend, fused into the same HBM pass.
    """
    B, L, C = x.shape
    if kernel_size < 1 or stride < 1:
        raise ValueError("kernel_size and stride must be >= 1")
    Lout = (L + 2 - kernel_size) // stride + 1
    if Lout <= 0:
        raise ValueError(
            f"Invalid config: L={L}, kernel_size={kernel_size} -> Lout={Lout}")
    if return_residual and (stride != 1 or Lout != L):
        raise ValueError("Fused residual requires stride == 1 and Lout == L")

    itemsize = jnp.dtype(x.dtype).itemsize
    n_out = 2 if return_residual else 1

    # Generation-aware VMEM budgeting (v7x: 64 MiB/TC; v5e/v6e: 128 MiB).
    try:
        vmem_cap = int(getattr(pltpu.get_tpu_info(), "vmem_capacity_bytes",
                               64 * 2**20))
    except Exception:
        vmem_cap = 64 * 2**20
    budget = (8 * 2**20) if vmem_cap <= 96 * 2**20 else (20 * 2**20)

    bt, ct, vmem_est = _pick_tiles(B, L, Lout, C, itemsize, n_out, budget)
    n_b = pl.cdiv(B, bt)
    n_c = pl.cdiv(C, ct)

    # TODO(synk): very long sequences would additionally need seq-axis tiling
    # with a (kernel_size - 1)-row halo; FBM sequence lengths fit one block.

    kernel = functools.partial(
        _moving_avg_kernel, kernel_size=kernel_size, stride=stride,
        l_in=L, l_out=Lout, with_residual=return_residual)

    in_specs = [pl.BlockSpec((bt, L, ct), lambda b, c: (b, 0, c))]
    trend_spec = pl.BlockSpec((bt, Lout, ct), lambda b, c: (b, 0, c))
    if return_residual:
        out_shape = (jax.ShapeDtypeStruct((B, Lout, C), x.dtype),
                     jax.ShapeDtypeStruct((B, Lout, C), x.dtype))
        out_specs = (trend_spec,
                     pl.BlockSpec((bt, Lout, ct), lambda b, c: (b, 0, c)))
    else:
        out_shape = jax.ShapeDtypeStruct((B, Lout, C), x.dtype)
        out_specs = trend_spec

    hbm_bytes = int((B * L * C + n_out * B * Lout * C) * itemsize)
    flops = int(B * Lout * C * (kernel_size + (1 if return_residual else 0)))
    vmem_limit = int(min(int(0.8 * vmem_cap),
                         max(32 * 2**20, int(1.5 * vmem_est) + (4 << 20))))

    return pl.pallas_call(
        kernel,
        out_shape=out_shape,
        grid_spec=pltpu.PrefetchScalarGridSpec(
            num_scalar_prefetch=0,
            grid=(n_b, n_c),
            in_specs=in_specs,
            out_specs=out_specs),
        compiler_params=pltpu.CompilerParams(
            dimension_semantics=("parallel", "parallel"),
            vmem_limit_bytes=vmem_limit),
        cost_estimate=pl.CostEstimate(
            flops=flops, transcendentals=0, bytes_accessed=hbm_bytes),
    )(x)


def _reference(x, kernel_size, stride):
    # pure-JAX reference for correctness
    front = x[:, 0:1, :]
    end = x[:, -1:, :]
    xp = jnp.concatenate([front, x, end], axis=1)
    Lout = (xp.shape[1] - kernel_size) // stride + 1
    rows = [jnp.mean(xp[:, i * stride:i * stride + kernel_size, :], axis=1)
            for i in range(Lout)]
    return jnp.stack(rows, axis=1)


if __name__ == "__main__":
    # moving_avg has no learnable parameters; only kernel_size/stride config.

    # Config A: canonical FBM decomposition setting (kernel_size=3, stride=1,
    # Lout == L), also exercising the fused-residual output.
    B, L, C = 2, 8, 32
    x = jax.random.normal(jax.random.PRNGKey(0), (B, L, C), dtype=jnp.float32)
    trend, resid = moving_avg(x, 3, 1, return_residual=True)
    trend = jax.block_until_ready(trend)
    resid = jax.block_until_ready(resid)
    trend_ref = _reference(x, 3, 1)
    assert trend.shape == trend_ref.shape
    assert jnp.allclose(trend, trend_ref, atol=1e-5, rtol=1e-5)
    assert jnp.allclose(resid, x - trend_ref, atol=1e-5, rtol=1e-5)

    # Plain (module-equivalent) single-output path.
    y = jax.block_until_ready(moving_avg(x, 3, 1))
    assert jnp.allclose(y, trend_ref, atol=1e-5, rtol=1e-5)

    # Config B: larger window + 128-multiple channel dim (lane-dense stores,
    # channel-tiling path).
    x2 = jax.random.normal(jax.random.PRNGKey(1), (2, 16, 256), dtype=jnp.float32)
    y2 = jax.block_until_ready(moving_avg(x2, 5, 1))
    y2_ref = _reference(x2, 5, 1)
    assert y2.shape == y2_ref.shape
    assert jnp.allclose(y2, y2_ref, atol=1e-5, rtol=1e-5)

    # Config C: stride > 1 plus a non-128-multiple channel dim > 128
    # (exercises the strided bulk slices and the masked channel-tail tile).
    x3 = jax.random.normal(jax.random.PRNGKey(2), (2, 12, 160), dtype=jnp.float32)
    y3 = jax.block_until_ready(moving_avg(x3, 3, 2))
    y3_ref = _reference(x3, 3, 2)
    assert y3.shape == y3_ref.shape
    assert jnp.allclose(y3, y3_ref, atol=1e-5, rtol=1e-5)

    print("KERNEL_OK")
</pallas_src>

<mosaic_0001>
module attributes {stable_mosaic.version = 11 : i64} {
  func.func @_moving_avg_kernel(%arg0: i32, %arg1: i32, %arg2: memref<1x8x32xf32, #tpu.memory_space<vmem>>, %arg3: memref<1x8x32xf32, #tpu.memory_space<vmem>>, %arg4: memref<1x8x32xf32, #tpu.memory_space<vmem>>) attributes {dimension_semantics = [#tpu.dimension_semantics<parallel>, #tpu.dimension_semantics<parallel>], iteration_bounds = array<i64: 2, 1>, scalar_prefetch = 0 : i64, scratch_operands = 0 : i64, tpu.core_type = #tpu.core_type<tc>, window_params = [{transform_indices = @transform_0, window_bounds = array<i64: 1, 8, 32>}, {transform_indices = @transform_1, window_bounds = array<i64: 1, 8, 32>}, {transform_indices = @transform_2, window_bounds = array<i64: 1, 8, 32>}]} {
    %c0 = arith.constant 0 : index
    %c0_0 = arith.constant 0 : index
    %c0_1 = arith.constant 0 : index
    %0 = vector.load %arg2[%c0, %c0_0, %c0_1] : memref<1x8x32xf32, #tpu.memory_space<vmem>>, vector<1x6x32xf32>
    %c0_2 = arith.constant 0 : index
    %c1 = arith.constant 1 : index
    %c0_3 = arith.constant 0 : index
    %1 = vector.load %arg2[%c0_2, %c1, %c0_3] : memref<1x8x32xf32, #tpu.memory_space<vmem>>, vector<1x6x32xf32>
    %c0_4 = arith.constant 0 : index
    %c2 = arith.constant 2 : index
    %c0_5 = arith.constant 0 : index
    %2 = vector.load %arg2[%c0_4, %c2, %c0_5] : memref<1x8x32xf32, #tpu.memory_space<vmem>>, vector<1x6x32xf32>
    %3 = arith.addf %0, %1 : vector<1x6x32xf32>
    %4 = arith.addf %3, %2 : vector<1x6x32xf32>
    %cst = arith.constant 0.333333343 : f32
    %5 = vector.broadcast %cst : f32 to vector<1x6x32xf32>
    %6 = arith.mulf %4, %5 : vector<1x6x32xf32>
    %c0_6 = arith.constant 0 : index
    %c1_7 = arith.constant 1 : index
    %c0_8 = arith.constant 0 : index
    %7 = vector.load %arg3[%c0_6, %c1_7, %c0_8] : memref<1x8x32xf32, #tpu.memory_space<vmem>>, vector<1x6x32xf32>
    tpu.vector_store %arg3[%c0_6, %c1_7, %c0_8], %6 {strides = array<i32>} : memref<1x8x32xf32, #tpu.memory_space<vmem>>, vector<1x6x32xf32>,
    %c0_9 = arith.constant 0 : index
    %c1_10 = arith.constant 1 : index
    %c0_11 = arith.constant 0 : index
    %8 = vector.load %arg2[%c0_9, %c1_10, %c0_11] : memref<1x8x32xf32, #tpu.memory_space<vmem>>, vector<1x6x32xf32>
    %9 = arith.subf %8, %6 : vector<1x6x32xf32>
    %c0_12 = arith.constant 0 : index
    %c1_13 = arith.constant 1 : index
    %c0_14 = arith.constant 0 : index
    %10 = vector.load %arg4[%c0_12, %c1_13, %c0_14] : memref<1x8x32xf32, #tpu.memory_space<vmem>>, vector<1x6x32xf32>
    tpu.vector_store %arg4[%c0_12, %c1_13, %c0_14], %9 {strides = array<i32>} : memref<1x8x32xf32, #tpu.memory_space<vmem>>, vector<1x6x32xf32>,
    %c0_15 = arith.constant 0 : index
    %c0_16 = arith.constant 0 : index
    %c0_17 = arith.constant 0 : index
    %11 = vector.load %arg2[%c0_15, %c0_16, %c0_17] : memref<1x8x32xf32, #tpu.memory_space<vmem>>, vector<1x2x32xf32>
    %cst_18 = arith.constant dense<0.000000e+00> : vector<1x32xf32>
    %12 = vector.multi_reduction <add>, %11, %cst_18 [1] : vector<1x2x32xf32> to vector<1x32xf32>
    %13 = vector.shape_cast %12 : vector<1x32xf32> to vector<1x1x32xf32>
    %c0_19 = arith.constant 0 : index
    %c0_20 = arith.constant 0 : index
    %c0_21 = arith.constant 0 : index
    %14 = vector.load %arg2[%c0_19, %c0_20, %c0_21] : memref<1x8x32xf32, #tpu.memory_space<vmem>>, vector<1x1x32xf32>
    %cst_22 = arith.constant 1.000000e+00 : f32
    %15 = vector.broadcast %cst_22 : f32 to vector<1x1x32xf32>
    %16 = arith.mulf %14, %15 : vector<1x1x32xf32>
    %17 = arith.addf %13, %16 : vector<1x1x32xf32>
    %cst_23 = arith.constant 0.333333343 : f32
    %18 = vector.broadcast %cst_23 : f32 to vector<1x1x32xf32>
    %19 = arith.mulf %17, %18 : vector<1x1x32xf32>
    %c0_24 = arith.constant 0 : index
    %c0_25 = arith.constant 0 : index
    %c0_26 = arith.constant 0 : index
    %20 = vector.load %arg3[%c0_24, %c0_25, %c0_26] : memref<1x8x32xf32, #tpu.memory_space<vmem>>, vector<1x1x32xf32>
    tpu.vector_store %arg3[%c0_24, %c0_25, %c0_26], %19 {strides = array<i32>} : memref<1x8x32xf32, #tpu.memory_space<vmem>>, vector<1x1x32xf32>,
    %c0_27 = arith.constant 0 : index
    %c0_28 = arith.constant 0 : index
    %c0_29 = arith.constant 0 : index
    %21 = vector.load %arg2[%c0_27, %c0_28, %c0_29] : memref<1x8x32xf32, #tpu.memory_space<vmem>>, vector<1x1x32xf32>
    %22 = arith.subf %21, %19 : vector<1x1x32xf32>
    %c0_30 = arith.constant 0 : index
    %c0_31 = arith.constant 0 : index
    %c0_32 = arith.constant 0 : index
    %23 = vector.load %arg4[%c0_30, %c0_31, %c0_32] : memref<1x8x32xf32, #tpu.memory_space<vmem>>, vector<1x1x32xf32>
    tpu.vector_store %arg4[%c0_30, %c0_31, %c0_32], %22 {strides = array<i32>} : memref<1x8x32xf32, #tpu.memory_space<vmem>>, vector<1x1x32xf32>,
    %c0_33 = arith.constant 0 : index
    %c6 = arith.constant 6 : index
    %c0_34 = arith.constant 0 : index
    %24 = vector.load %arg2[%c0_33, %c6, %c0_34] : memref<1x8x32xf32, #tpu.memory_space<vmem>>, vector<1x2x32xf32>
    %cst_35 = arith.constant dense<0.000000e+00> : vector<1x32xf32>
    %25 = vector.multi_reduction <add>, %24, %cst_35 [1] : vector<1x2x32xf32> to vector<1x32xf32>
    %26 = vector.shape_cast %25 : vector<1x32xf32> to vector<1x1x32xf32>
    %c0_36 = arith.constant 0 : index
    %c7 = arith.constant 7 : index
    %c0_37 = arith.constant 0 : index
    %27 = vector.load %arg2[%c0_36, %c7, %c0_37] : memref<1x8x32xf32, #tpu.memory_space<vmem>>, vector<1x1x32xf32>
    %cst_38 = arith.constant 1.000000e+00 : f32
    %28 = vector.broadcast %cst_38 : f32 to vector<1x1x32xf32>
    %29 = arith.mulf %27, %28 : vector<1x1x32xf32>
    %30 = arith.addf %26, %29 : vector<1x1x32xf32>
    %cst_39 = arith.constant 0.333333343 : f32
    %31 = vector.broadcast %cst_39 : f32 to vector<1x1x32xf32>
    %32 = arith.mulf %30, %31 : vector<1x1x32xf32>
    %c0_40 = arith.constant 0 : index
    %c7_41 = arith.constant 7 : index
    %c0_42 = arith.constant 0 : index
    %33 = vector.load %arg3[%c0_40, %c7_41, %c0_42] : memref<1x8x32xf32, #tpu.memory_space<vmem>>, vector<1x1x32xf32>
    tpu.vector_store %arg3[%c0_40, %c7_41, %c0_42], %32 {strides = array<i32>} : memref<1x8x32xf32, #tpu.memory_space<vmem>>, vector<1x1x32xf32>,
    %c0_43 = arith.constant 0 : index
    %c7_44 = arith.constant 7 : index
    %c0_45 = arith.constant 0 : index
    %34 = vector.load %arg2[%c0_43, %c7_44, %c0_45] : memref<1x8x32xf32, #tpu.memory_space<vmem>>, vector<1x1x32xf32>
    %35 = arith.subf %34, %32 : vector<1x1x32xf32>
    %c0_46 = arith.constant 0 : index
    %c7_47 = arith.constant 7 : index
    %c0_48 = arith.constant 0 : index
    %36 = vector.load %arg4[%c0_46, %c7_47, %c0_48] : memref<1x8x32xf32, #tpu.memory_space<vmem>>, vector<1x1x32xf32>
    tpu.vector_store %arg4[%c0_46, %c7_47, %c0_48], %35 {strides = array<i32>} : memref<1x8x32xf32, #tpu.memory_space<vmem>>, vector<1x1x32xf32>,
    return
  }
  func.func @transform_0(%arg0: i32, %arg1: i32) -> (i32, i32, i32) {
    %c0_i32 = arith.constant 0 : i32
    %c0_i32_0 = arith.constant 0 : i32
    return %arg0, %c0_i32, %arg1 : i32, i32, i32
  }
  func.func @transform_1(%arg0: i32, %arg1: i32) -> (i32, i32, i32) {
    %c0_i32 = arith.constant 0 : i32
    %c0_i32_0 = arith.constant 0 : i32
    return %arg0, %c0_i32, %arg1 : i32, i32, i32
  }
  func.func @transform_2(%arg0: i32, %arg1: i32) -> (i32, i32, i32) {
    %c0_i32 = arith.constant 0 : i32
    %c0_i32_0 = arith.constant 0 : i32
    return %arg0, %c0_i32, %arg1 : i32, i32, i32
  }
}

</mosaic_0001>

<llo_original>
// kernel: tpu_custom_call.1
$region0: #{tpu_custom_call.1}
  #allocation0 [shape = 'u32[]', space=smem, size = 0x4, offset = 0x4, fixed_abs, tag = 'smem constant byte address 0x4 - core index']
  #allocation1 [shape = 'u32[144,128]{1,0:T(1,128)}', space=vmem, size = 0x12000, scoped, tag = 'internal scratch']
  %s0 = inlined_call_operand.hbm [shape: f32[2,8,32], index: 0, kind: input, shape index: {}]
  %s1 = inlined_call_operand.hbm [shape: f32[2,8,32], index: 1, kind: output, shape index: {0}]
  %s2 = inlined_call_operand.hbm [shape: f32[2,8,32], index: 2, kind: output, shape index: {1}]
  %3 = xla_tuple %s1, %s2
  %s4 = sld [smem:[#allocation0]]
  $region49: #{tpu_custom_call.1} parent=0
    _
  %s6 = ssub.s32 1, %s4
  %s7 = scalar_select 0, %s6, %s4
  $region1: #{tpu_custom_call.1} parent=0
    #allocation2 [shape = 'u8[8192]{0}', space=vmem, size = 0x2000, scoped, tag = 'input window, operand 0']
    #allocation3 [shape = 's32[2]{0}', space=sflag, size = 0x8, scoped, tag = 'scoped memory for tpu_custom_call.1']
    #allocation4 [shape = 's32[2]{0}', space=sflag, size = 0x8, scoped, tag = 'scoped memory for tpu_custom_call.1']
    #allocation5 [shape = 'u8[8192]{0}', space=vmem, size = 0x2000, scoped, tag = 'output window, operand 0']
    #allocation6 [shape = 'u8[8192]{0}', space=vmem, size = 0x2000, scoped, tag = 'output window, operand 1']
    #allocation7 [shape = 's32[2]{0}', space=sflag, size = 0x8, scoped, tag = 'scoped memory for tpu_custom_call.1']
    %8 = vsyncpa [#allocation3], 0
    %s9 = scalar_lea.sflag [#allocation3], 1
    %10 = vsyncpa %s9, 0
    %11 = vsyncpa [#allocation4], 0
    %s12 = scalar_lea.sflag [#allocation4], 1
    %13 = vsyncpa %s12, 0
    %14 = vsyncpa [#allocation7], 0
    %s15 = scalar_lea.sflag [#allocation7], 1
    %16 = vsyncpa %s15, 0
    loop: start=0, step=1, limit=4
    $region2: #{tpu_custom_call.1} parent=1 // loop_pre_header
      _
    $region3: #{tpu_custom_call.1} parent=1 // loop_header
      %s18 = sphi 0, %s22
      %p19 = scmp.ge.s32.totalorder %s18, 4
      %s25 = sphi 0, %s37
      %s26 = sphi 0, %s33
      %s27 = sphi 0, %s25
      %s28 = sphi 0, %s26
      %s29 = sphi 0, %s27
      %s30 = sphi 0, %s28
      %s42 = sphi 0, %s44
      %s45 = sphi 0, %s42
      %s46 = sphi 0, %s45
      %s62 = sphi 0, %s46
      %s70 = sphi 0, %s72
      %s73 = sphi 0, %s70
      %s74 = sphi 0, %s73
      %s90 = sphi 0, %s74
      %s98 = sphi 0, %s100
      %s101 = sphi 0, %s98
      %s102 = sphi 0, %s101
      %s118 = sphi 0, %s102
    $region4: #{tpu_custom_call.1} parent=1 // loop_header_branch
      %21 = sbr.rel (%p19) target = $region8
    $region5: #{tpu_custom_call.1} parent=1 // loop_body
      %s23 = ssub.s32 %s18, 1
      %s24 = ssub.s32 %s18, 2
      %s31 = sadd.s32 1, %s26
      %p32 = scmp.ge.s32.totalorder %s31, 1
      %s33 = scalar_select %p32, 0, %s31
      %s34 = sadd.s32 1, %s25
      %s35 = scalar_select %p32, %s34, %s25
      %p36 = scmp.ge.s32.totalorder %s35, 2
      %s37 = scalar_select %p36, 0, %s35
      %s38 = ssub.s32 %s25, %s37
      %s39 = ssub.s32 %s26, %s33
      %s40 = sor.u32 %s38, %s39
      %p41 = scmp.eq.s32.totalorder %s40, 0
      %s43 = sadd.s32 %s42, 1
      %s44 = scalar_select %p41, %s42, %s43
      %p47 = pneg %p41
      %p48 = scmp.eq.s32.totalorder %s18, 1
      %p49 = por %p47, %p48
      %p50 = scmp.ne.s32.totalorder %s42, %s45
      %p51 = scmp.eq.s32.totalorder %s18, 0
      %p52 = por %p50, %p51
      %p53 = scmp.ne.s32.totalorder %s42, %s45
      %p54 = scmp.eq.s32.totalorder %s23, 1
      %p55 = por %p53, %p54
      %p56 = scmp.ne.s32.totalorder %s45, %s46
      %p57 = scmp.eq.s32.totalorder %s23, 0
      %p58 = por %p56, %p57
      %p59 = scmp.ne.s32.totalorder %s45, %s46
      %p60 = scmp.eq.s32.totalorder %s24, 1
      %p61 = por %p59, %p60
      %p63 = scmp.ne.s32.totalorder %s46, %s62
      %p64 = scmp.eq.s32.totalorder %s24, 0
      %p65 = por %p63, %p64
      %s66 = ssub.s32 %s25, %s37
      %s67 = ssub.s32 %s26, %s33
      %s68 = sor.u32 %s66, %s67
      %p69 = scmp.eq.s32.totalorder %s68, 0
      %s71 = sadd.s32 %s70, 1
      %s72 = scalar_select %p69, %s70, %s71
      %p75 = pneg %p69
      %p76 = scmp.eq.s32.totalorder %s18, 1
      %p77 = por %p75, %p76
      %p78 = scmp.ne.s32.totalorder %s70, %s73
      %p79 = scmp.eq.s32.totalorder %s18, 0
      %p80 = por %p78, %p79
      %p81 = scmp.ne.s32.totalorder %s70, %s73
      %p82 = scmp.eq.s32.totalorder %s23, 1
      %p83 = por %p81, %p82
      %p84 = scmp.ne.s32.totalorder %s73, %s74
      %p85 = scmp.eq.s32.totalorder %s23, 0
      %p86 = por %p84, %p85
      %p87 = scmp.ne.s32.totalorder %s73, %s74
      %p88 = scmp.eq.s32.totalorder %s24, 1
      %p89 = por %p87, %p88
      %p91 = scmp.ne.s32.totalorder %s74, %s90
      %p92 = scmp.eq.s32.totalorder %s24, 0
      %p93 = por %p91, %p92
      %s94 = ssub.s32 %s25, %s37
      %s95 = ssub.s32 %s26, %s33
      %s96 = sor.u32 %s94, %s95
      %p97 = scmp.eq.s32.totalorder %s96, 0
      %s99 = sadd.s32 %s98, 1
      %s100 = scalar_select %p97, %s98, %s99
      %p103 = pneg %p97
      %p104 = scmp.eq.s32.totalorder %s18, 1
      %p105 = por %p103, %p104
      %p106 = scmp.ne.s32.totalorder %s98, %s101
      %p107 = scmp.eq.s32.totalorder %s18, 0
      %p108 = por %p106, %p107
      %p109 = scmp.ne.s32.totalorder %s98, %s101
      %p110 = scmp.eq.s32.totalorder %s23, 1
      %p111 = por %p109, %p110
      %p112 = scmp.ne.s32.totalorder %s101, %s102
      %p113 = scmp.eq.s32.totalorder %s23, 0
      %p114 = por %p112, %p113
      %p115 = scmp.ne.s32.totalorder %s101, %s102
      %p116 = scmp.eq.s32.totalorder %s24, 1
      %p117 = por %p115, %p116
      %p119 = scmp.ne.s32.totalorder %s102, %s118
      %p120 = scmp.eq.s32.totalorder %s24, 0
      %p121 = por %p119, %p120
      %p122 = scmp.le.s32.totalorder 1, %s18
      %p123 = scmp.lt.s32.totalorder %s18, 3
      %p124 = pnand %p122, %p123
      %p125 = pneg %p124
      // Predicated region
      $region9: #{tpu_custom_call.1} parent=5 // pred_check
        _
      $region10: #{tpu_custom_call.1} parent=5 // pred_check_branch
        %127 = sbr.rel (%p124) target = $region12
      $region11: #{tpu_custom_call.1} parent=5 // pred_region
        %s128 = ssub.s32 %s18, 1
      $region12: #{tpu_custom_call.1} parent=5 // pred_fallthru
        _
      %p129 = scmp.lt.s32.totalorder %s18, 2
      // Predicated region
      $region13: #{tpu_custom_call.1} parent=5 // pred_check
        %p130 = pneg %p129
      $region14: #{tpu_custom_call.1} parent=5 // pred_check_branch
        %132 = sbr.rel (%p130) target = $region16
      $region15: #{tpu_custom_call.1} parent=5 // pred_region
        // Predicated region
        $region17: #{tpu_custom_call.1} parent=15 // pred_check
          %p133 = pneg %p52
        $region18: #{tpu_custom_call.1} parent=15 // pred_check_branch
          %135 = sbr.rel (%p133) target = $region20
        $region19: #{tpu_custom_call.1} parent=15 // pred_region
          %s136 = sand.u32 %s42, 1
          %s137 = scalar_lea.sflag [#allocation3], %s136
          %s138 = sand.u32 %s42, 1
          %s139 = smul.addr %s138, 8
          %s140 = scalar_lea.vmem [#allocation2], %s139
          %s142 = ssub.s32 128, 128
          %143 = vsyncadd %s137, %s142
          %s144 = sadd.s32 %s26, %s25
          %s145 = smul.addr %s144, 128
          %s146 = scalar_lea.hbm %s0, %s145
          %s148 = sshll.u32 %s140, 4
          %s149 = int_to_ptr.vmem [resolvable:$true] %s148
          %151 = dma.hbm_to_vmem [thread:$0]  %s146, 128, %s149, %s137
        $region20: #{tpu_custom_call.1} parent=15 // pred_fallthru
          _
      $region16: #{tpu_custom_call.1} parent=5 // pred_fallthru
        _
      %p152 = scmp.le.s32.totalorder 1, %s18
      %p153 = scmp.lt.s32.totalorder %s18, 3
      %p154 = pnand %p152, %p153
      %p155 = pneg %p154
      // Predicated region
      $region21: #{tpu_custom_call.1} parent=5 // pred_check
        _
      $region22: #{tpu_custom_call.1} parent=5 // pred_check_branch
        %157 = sbr.rel (%p154) target = $region24
      $region23: #{tpu_custom_call.1} parent=5 // pred_region
        %s158 = ssub.s32 %s18, 1
        %s159 = sand.u32 %s45, 1
        %s160 = scalar_lea.sflag [#allocation3], %s159
        %s161 = sand.u32 %s45, 1
        %s162 = smul.addr %s161, 8
        %s163 = scalar_lea.vmem [#allocation2], %s162
        // Predicated region
        $region25: #{tpu_custom_call.1} parent=23 // pred_check
          %p164 = pneg %p58
        $region26: #{tpu_custom_call.1} parent=23 // pred_check_branch
          %166 = sbr.rel (%p164) target = $region28
        $region27: #{tpu_custom_call.1} parent=23 // pred_region
          %167 = dma.done %s160, 128
        $region28: #{tpu_custom_call.1} parent=23 // pred_fallthru
          _
        %s168 = sand.u32 %s45, 1
        %s169 = scalar_lea.sflag [#allocation3], %s168
        %s170 = sand.u32 %s45, 1
        %s171 = smul.addr %s170, 8
        %s172 = scalar_lea.vmem [#allocation2], %s171
        %p173 = pneg %p58
        %p174 = pneg %p55
        %p175 = pneg %p86
        %p176 = pneg %p83
        %s177 = sand.u32 %s73, 1
        %s178 = scalar_lea.sflag [#allocation4], %s177
        %s179 = sand.u32 %s73, 1
        %s180 = smul.addr %s179, 8
        %s181 = scalar_lea.vmem [#allocation5], %s180
        %p182 = pneg %p114
        %p183 = pneg %p111
        %s184 = sand.u32 %s101, 1
        %s185 = scalar_lea.sflag [#allocation7], %s184
        %s186 = sand.u32 %s101, 1
        %s187 = smul.addr %s186, 8
        %s188 = scalar_lea.vmem [#allocation6], %s187
        %v189 = vld [vmem:[%s163] sm:$0x3f]
        %v190 = vld [vmem:[%s163 + $0x1] sm:$0x3f]
        %v191 = vld [vmem:[%s163 + $0x2] sm:$0x3f]
        %v192 = vadd.f32 %v189, %v190
        %v193 = vadd.f32 %v192, %v191
        %v194 = vmul.f32 %v193, 0.33333334
        %vm195 = vcmask 259072
        %196 = vst.msk [vmem:[%s181 + $0x1] sm:$0x3f] %vm195, %v194
        %v197 = vld [vmem:[%s163 + $0x1] sm:$0x3f]
        %v198 = vsub.f32 %v197, %v194
        %199 = vst.msk [vmem:[%s188 + $0x1] sm:$0x3f] %vm195, %v198
        %v200 = vld [vmem:[%s163] sm:$0x3]
        %vm201 = vcmask 254976
        %v202 = vsel %vm201, %v200, 0.0
        %v203 = vrot.slane %v202, 4
        %v204 = vadd.f32 %v202, %v203
        %v205 = vrot.slane %v204, 2
        %v206 = vadd.f32 %v204, %v205
        %v207 = vrot.slane %v206, 1
        %v208 = vadd.f32 %v206, %v207
        %v209 = vld [vmem:[%s163] sm:$0x1]
        %v210 = vadd.f32 %v208, %v209
        %v211 = vmul.f32 %v210, 0.33333334
        %vm212 = vcmask 253952
        %213 = vst.msk [vmem:[%s181] sm:$0x1] %vm212, %v211
        %v214 = vld [vmem:[%s163] sm:$0x1]
        %v215 = vsub.f32 %v214, %v211
        %216 = vst.msk [vmem:[%s188] sm:$0x1] %vm212, %v215
        %v217 = vld [vmem:[%s163 + $0x6] sm:$0x3]
        %v218 = vsel %vm201, %v217, 0.0
        %v219 = vrot.slane %v218, 4
        %v220 = vadd.f32 %v218, %v219
        %v221 = vrot.slane %v220, 2
        %v222 = vadd.f32 %v220, %v221
        %v223 = vrot.slane %v222, 1
        %v224 = vadd.f32 %v222, %v223
        %v225 = vld [vmem:[%s163 + $0x7] sm:$0x1]
        %v226 = vadd.f32 %v224, %v225
        %v227 = vmul.f32 %v226, 0.33333334
        %228 = vst.msk [vmem:[%s181 + $0x7] sm:$0x1] %vm212, %v227
        %v229 = vld [vmem:[%s163 + $0x7] sm:$0x1]
        %v230 = vsub.f32 %v229, %v227
        %231 = vst.msk [vmem:[%s188 + $0x7] sm:$0x1] %vm212, %v230
        %s232 = sand.u32 %s73, 1
        %s233 = scalar_lea.sflag [#allocation4], %s232
        %s234 = sand.u32 %s73, 1
        %s235 = smul.addr %s234, 8
        %s236 = scalar_lea.vmem [#allocation5], %s235
        %s237 = sand.u32 %s101, 1
        %s238 = scalar_lea.sflag [#allocation7], %s237
        %s239 = sand.u32 %s101, 1
        %s240 = smul.addr %s239, 8
        %s241 = scalar_lea.vmem [#allocation6], %s240
        // Predicated region
        $region29: #{tpu_custom_call.1} parent=23 // pred_check
          %p242 = pneg %p83
        $region30: #{tpu_custom_call.1} parent=23 // pred_check_branch
          %244 = sbr.rel (%p242) target = $region32
        $region31: #{tpu_custom_call.1} parent=23 // pred_region
          %s246 = ssub.s32 128, 128
          %247 = vsyncadd %s233, %s246
          %s248 = sadd.s32 %s28, %s27
          %s249 = smul.addr %s248, 128
          %s250 = scalar_lea.hbm %s1, %s249
          %s252 = sshll.u32 %s236, 4
          %s253 = int_to_ptr.vmem [resolvable:$true] %s252
          %255 = dma.vmem_to_hbm [thread:$0]  %s253, 128, %s250, %s233
        $region32: #{tpu_custom_call.1} parent=23 // pred_fallthru
          _
        // Predicated region
        $region33: #{tpu_custom_call.1} parent=23 // pred_check
          %p256 = pneg %p111
        $region34: #{tpu_custom_call.1} parent=23 // pred_check_branch
          %258 = sbr.rel (%p256) target = $region36
        $region35: #{tpu_custom_call.1} parent=23 // pred_region
          %s260 = ssub.s32 128, 128
          %261 = vsyncadd %s238, %s260
          %s262 = sadd.s32 %s28, %s27
          %s263 = smul.addr %s262, 128
          %s264 = scalar_lea.hbm %s2, %s263
          %s266 = sshll.u32 %s241, 4
          %s267 = int_to_ptr.vmem [resolvable:$true] %s266
          %269 = dma.vmem_to_hbm [thread:$0]  %s267, 128, %s264, %s238
        $region36: #{tpu_custom_call.1} parent=23 // pred_fallthru
          _
      $region24: #{tpu_custom_call.1} parent=5 // pred_fallthru
        _
      %p270 = scmp.le.s32.totalorder 2, %s18
      // Predicated region
      $region37: #{tpu_custom_call.1} parent=5 // pred_check
        %p271 = pneg %p270
      $region38: #{tpu_custom_call.1} parent=5 // pred_check_branch
        %273 = sbr.rel (%p271) target = $region40
      $region39: #{tpu_custom_call.1} parent=5 // pred_region
        %s274 = ssub.s32 %s18, 2
        // Predicated region
        $region41: #{tpu_custom_call.1} parent=39 // pred_check
          %p275 = pneg %p89
        $region42: #{tpu_custom_call.1} parent=39 // pred_check_branch
          %277 = sbr.rel (%p275) target = $region44
        $region43: #{tpu_custom_call.1} parent=39 // pred_region
          %s278 = sand.u32 %s74, 1
          %s279 = scalar_lea.sflag [#allocation4], %s278
          %s280 = sand.u32 %s74, 1
          %s281 = smul.addr %s280, 8
          %s282 = scalar_lea.vmem [#allocation5], %s281
          %283 = dma.done %s279, 128
        $region44: #{tpu_custom_call.1} parent=39 // pred_fallthru
          _
        // Predicated region
        $region45: #{tpu_custom_call.1} parent=39 // pred_check
          %p284 = pneg %p117
        $region46: #{tpu_custom_call.1} parent=39 // pred_check_branch
          %286 = sbr.rel (%p284) target = $region48
        $region47: #{tpu_custom_call.1} parent=39 // pred_region
          %s287 = sand.u32 %s102, 1
          %s288 = scalar_lea.sflag [#allocation7], %s287
          %s289 = sand.u32 %s102, 1
          %s290 = smul.addr %s289, 8
          %s291 = scalar_lea.vmem [#allocation6], %s290
          %292 = dma.done %s288, 128
        $region48: #{tpu_custom_call.1} parent=39 // pred_fallthru
          _
      $region40: #{tpu_custom_call.1} parent=5 // pred_fallthru
        _
    $region6: #{tpu_custom_call.1} parent=1 // loop_footer
      %s22 = sadd.s32 1, %s18
    $region7: #{tpu_custom_call.1} parent=1 // loop_footer_branch
      %17 = sbr.rel target = $region3
    $region8: #{tpu_custom_call.1} parent=1 // loop_exit
      _
    %293 = vsyncpa [#allocation3], 1
    %s294 = scalar_lea.sflag [#allocation3], 1
    %295 = vsyncpa %s294, 1
    %296 = vsyncpa [#allocation4], 1
    %s297 = scalar_lea.sflag [#allocation4], 1
    %298 = vsyncpa %s297, 1
    %299 = vsyncpa [#allocation7], 1
    %s300 = scalar_lea.sflag [#allocation7], 1
    %301 = vsyncpa %s300, 1

</llo_original>
